<compile_context>
chip_gen: v6e
topology: v6e:2x2x1
jax: 0.10.0
libtpu: 0.0.40
codegen_flags: <defaults>
</compile_context>

<pallas_src>
import functools

import jax
import jax.numpy as jnp
from jax.experimental import pallas as pl
from jax.experimental.pallas import tpu as pltpu


def _round_up(x, m):
    return ((x + m - 1) // m) * m


def _critic_kernel(s_ref, a_ref, p_ref, q_ref, *, ds, da, hp, cds, c2, c3):
    # Static parameter views into the packed slab (all offsets are Python ints).
    w1s = p_ref[:, 0:ds]              # [H, ds]   fc1 weight (state columns), transposed
    w1a = p_ref[:, cds:cds + da]      # [H, da]   fc1 weight (action columns), transposed
    w2 = p_ref[:, c2:c2 + hp]         # [H, H]    fc2 weight, transposed
    b1 = p_ref[:, c3:c3 + 1]          # [H, 1]
    b2 = p_ref[:, c3 + 1:c3 + 2]      # [H, 1]
    w3 = p_ref[:, c3 + 2:c3 + 3]      # [H, 1]    fc3 weight (column)
    b3 = p_ref[0:1, c3 + 3:c3 + 4]    # [1, 1]    fc3 bias

    s_t = s_ref[...]                  # [ds, tm]  (batch on lanes)
    a_t = a_ref[...]                  # [da, tm]

    # fc1: (cat(s, a) @ W1)^T == W1_s^T @ s^T + W1_a^T @ a^T
    h = jnp.dot(w1s, s_t, preferred_element_type=jnp.float32)
    h = h + jnp.dot(w1a, a_t, preferred_element_type=jnp.float32)
    h = jnp.maximum(h + b1, 0.0)      # [H, tm]

    # fc2
    h = jnp.dot(w2, h, preferred_element_type=jnp.float32)
    h = jnp.maximum(h + b2, 0.0)      # [H, tm]

    # fc3: width-1 output -> multiply + cross-sublane reduction, lane-dense row.
    q = jnp.sum(h * w3, axis=0, keepdims=True) + b3   # [1, tm]
    q_ref[...] = q.astype(q_ref.dtype)


def mlp_critic_forward(state, action, slab, *, tile_m=1024):
    """Pallas forward of MLPCritic. Returns (q, q, q) like the PyTorch module."""
    assert tile_m % 128 == 0
    state = state.astype(jnp.float32)
    action = action.astype(jnp.float32)
    b, ds = state.shape
    da = action.shape[1]

    # Slab layout metadata (derived from shapes; matches pack_params).
    hp = slab.shape[0]
    cds = _round_up(ds, 128)
    c2 = cds + _round_up(da, 128)
    c3 = c2 + _round_up(hp, 128)
    assert slab.shape[1] == c3 + 128, "param slab does not match state/action dims"

    tm = min(tile_m, _round_up(b, 128))     # batch tile on the lane axis
    b_pad = _round_up(b, tm)

    s_t = state.T                           # [ds, B]  (layout plumbing, off hot path)
    a_t = action.T                          # [da, B]
    if b_pad != b:
        s_t = jnp.pad(s_t, ((0, 0), (0, b_pad - b)))
        a_t = jnp.pad(a_t, ((0, 0), (0, b_pad - b)))

    kernel = functools.partial(_critic_kernel, ds=ds, da=da, hp=hp,
                               cds=cds, c2=c2, c3=c3)

    q_row = pl.pallas_call(
        kernel,
        out_shape=jax.ShapeDtypeStruct((1, b_pad), jnp.float32),
        grid_spec=pltpu.PrefetchScalarGridSpec(
            num_scalar_prefetch=0,
            grid=(b_pad // tm,),
            in_specs=[
                pl.BlockSpec((ds, tm), lambda i: (0, i)),
                pl.BlockSpec((da, tm), lambda i: (0, i)),
                pl.BlockSpec(slab.shape, lambda i: (0, 0)),   # DMA'd once
            ],
            out_specs=pl.BlockSpec((1, tm), lambda i: (0, i)),
        ),
        compiler_params=pltpu.CompilerParams(
            dimension_semantics=("parallel",)),
    )(s_t, a_t, slab)

    q = q_row.reshape(-1)[:b].reshape(b, 1)
    # PyTorch forward returns the same tensor three times.
    return q, q, q


def init_params(key, dim_state, dim_action, hidden_dim):
    """PyTorch-Linear-like uniform init. Weights stored [in, out]."""
    dims = [
        ("w1", "b1", dim_state + dim_action, hidden_dim),
        ("w2", "b2", hidden_dim, hidden_dim),
        ("w3", "b3", hidden_dim, 1),
    ]
    params = {}
    for wname, bname, fan_in, fan_out in dims:
        key, kw, kb = jax.random.split(key, 3)
        bound = 1.0 / jnp.sqrt(jnp.float32(fan_in))
        params[wname] = jax.random.uniform(
            kw, (fan_in, fan_out), jnp.float32, minval=-bound, maxval=bound)
        params[bname] = jax.random.uniform(
            kb, (1, fan_out), jnp.float32, minval=-bound, maxval=bound)
    return params


def pack_params(params, dim_state, dim_action, hidden_dim):
    """Pack all params into one f32 slab [H_pad, C] with 128-lane-aligned
    sections, weights stored transposed ([out, in]) for the batch-on-lanes
    kernel. Done once, off the hot path."""
    ds, da, h = dim_state, dim_action, hidden_dim
    hp = _round_up(h, 8)
    cds = _round_up(ds, 128)
    c2 = cds + _round_up(da, 128)
    c3 = c2 + _round_up(hp, 128)
    cols = c3 + 128

    w1 = params["w1"]                                   # [ds+da, H]
    slab = jnp.zeros((hp, cols), jnp.float32)
    slab = slab.at[:h, 0:ds].set(w1[:ds, :].T)          # fc1 (state cols), transposed
    slab = slab.at[:h, cds:cds + da].set(w1[ds:ds + da, :].T)  # fc1 (action cols)
    slab = slab.at[:h, c2:c2 + h].set(params["w2"].T)   # fc2, transposed
    slab = slab.at[:h, c3].set(params["b1"][0])         # b1 column
    slab = slab.at[:h, c3 + 1].set(params["b2"][0])     # b2 column
    slab = slab.at[:h, c3 + 2].set(params["w3"][:, 0])  # fc3 weight column
    slab = slab.at[0, c3 + 3].set(params["b3"][0, 0])   # fc3 bias
    return slab


def _reference_forward(state, action, params):
    x = jnp.concatenate([state, action], axis=1)
    h = jax.nn.relu(x @ params["w1"] + params["b1"])
    h = jax.nn.relu(h @ params["w2"] + params["b2"])
    q = h @ params["w3"] + params["b3"]
    return q, q, q


if __name__ == "__main__":
    dim_state, dim_action, hidden_dim, batch = 8, 4, 32, 2

    key = jax.random.PRNGKey(0)
    key, ks, ka, kp = jax.random.split(key, 4)
    state = jax.random.normal(ks, (batch, dim_state), jnp.float32)
    action = jax.random.normal(ka, (batch, dim_action), jnp.float32)
    params = init_params(kp, dim_state, dim_action, hidden_dim)
    slab = pack_params(params, dim_state, dim_action, hidden_dim)

    q1, q2, q3 = jax.block_until_ready(mlp_critic_forward(state, action, slab))
    r1, r2, r3 = _reference_forward(state, action, params)

    assert q1.shape == (batch, 1) and q2.shape == (batch, 1) and q3.shape == (batch, 1)
    assert jnp.allclose(q1, r1, atol=1e-4, rtol=1e-4)
    assert jnp.allclose(q2, r2, atol=1e-4, rtol=1e-4)
    assert jnp.allclose(q3, r3, atol=1e-4, rtol=1e-4)

    # Second check: exercise the multi-tile batch grid and padding path.
    kb1, kb2 = jax.random.split(key)
    state2 = jax.random.normal(kb1, (200, dim_state), jnp.float32)
    action2 = jax.random.normal(kb2, (200, dim_action), jnp.float32)
    qg, _, _ = jax.block_until_ready(
        mlp_critic_forward(state2, action2, slab, tile_m=128))
    rg, _, _ = _reference_forward(state2, action2, params)
    assert qg.shape == (200, 1)
    assert jnp.allclose(qg, rg, atol=1e-4, rtol=1e-4)

    print("KERNEL_OK")
</pallas_src>

<mosaic_0001>
module attributes {stable_mosaic.version = 11 : i64} {
  func.func @_critic_kernel(%arg0: i32, %arg1: memref<8x128xf32, #tpu.memory_space<vmem>>, %arg2: memref<4x128xf32, #tpu.memory_space<vmem>>, %arg3: memref<32x512xf32, #tpu.memory_space<vmem>>, %arg4: memref<1x128xf32, #tpu.memory_space<vmem>>) attributes {dimension_semantics = [#tpu.dimension_semantics<parallel>], iteration_bounds = array<i64: 1>, scalar_prefetch = 0 : i64, scratch_operands = 0 : i64, tpu.core_type = #tpu.core_type<tc>, window_params = [{transform_indices = @transform_0, window_bounds = array<i64: 8, 128>}, {transform_indices = @transform_1, window_bounds = array<i64: 4, 128>}, {pipeline_mode = #tpu.pipeline_mode<synchronous>, transform_indices = @transform_2, window_bounds = array<i64: 32, 512>}, {transform_indices = @transform_3, window_bounds = array<i64: 1, 128>}]} {
    %c0 = arith.constant 0 : index
    %c0_0 = arith.constant 0 : index
    %0 = vector.load %arg3[%c0, %c0_0] : memref<32x512xf32, #tpu.memory_space<vmem>>, vector<32x8xf32>
    %c0_1 = arith.constant 0 : index
    %c128 = arith.constant 128 : index
    %1 = vector.load %arg3[%c0_1, %c128] : memref<32x512xf32, #tpu.memory_space<vmem>>, vector<32x4xf32>
    %c0_2 = arith.constant 0 : index
    %c256 = arith.constant 256 : index
    %2 = vector.load %arg3[%c0_2, %c256] : memref<32x512xf32, #tpu.memory_space<vmem>>, vector<32x32xf32>
    %c0_3 = arith.constant 0 : index
    %c384 = arith.constant 384 : index
    %3 = vector.load %arg3[%c0_3, %c384] : memref<32x512xf32, #tpu.memory_space<vmem>>, vector<32x1xf32>
    %c0_4 = arith.constant 0 : index
    %c385 = arith.constant 385 : index
    %4 = vector.load %arg3[%c0_4, %c385] : memref<32x512xf32, #tpu.memory_space<vmem>>, vector<32x1xf32>
    %c0_5 = arith.constant 0 : index
    %c386 = arith.constant 386 : index
    %5 = vector.load %arg3[%c0_5, %c386] : memref<32x512xf32, #tpu.memory_space<vmem>>, vector<32x1xf32>
    %c0_6 = arith.constant 0 : index
    %c387 = arith.constant 387 : index
    %6 = vector.load %arg3[%c0_6, %c387] : memref<32x512xf32, #tpu.memory_space<vmem>>, vector<1x1xf32>
    %c0_7 = arith.constant 0 : index
    %c0_8 = arith.constant 0 : index
    %7 = vector.load %arg1[%c0_7, %c0_8] : memref<8x128xf32, #tpu.memory_space<vmem>>, vector<8x128xf32>
    %c0_9 = arith.constant 0 : index
    %c0_10 = arith.constant 0 : index
    %8 = vector.load %arg2[%c0_9, %c0_10] : memref<4x128xf32, #tpu.memory_space<vmem>>, vector<4x128xf32>
    %cst = arith.constant dense<0.000000e+00> : vector<32x128xf32>
    %9 = tpu.matmul %0, %7, %cst {dimension_numbers = #tpu.dot_dimension_numbers<[1], [0], [0], [1], [0, 0, 1, 1], [], []>} : vector<32x8xf32>, vector<8x128xf32>, vector<32x128xf32> -> vector<32x128xf32>
    %cst_11 = arith.constant dense<0.000000e+00> : vector<32x128xf32>
    %10 = tpu.matmul %1, %8, %cst_11 {dimension_numbers = #tpu.dot_dimension_numbers<[1], [0], [0], [1], [0, 0, 1, 1], [], []>} : vector<32x4xf32>, vector<4x128xf32>, vector<32x128xf32> -> vector<32x128xf32>
    %11 = arith.addf %9, %10 : vector<32x128xf32>
    %12 = vector.broadcast %3 : vector<32x1xf32> to vector<32x128xf32>
    %13 = arith.addf %11, %12 : vector<32x128xf32>
    %cst_12 = arith.constant 0.000000e+00 : f32
    %14 = vector.broadcast %cst_12 : f32 to vector<32x128xf32>
    %15 = arith.maximumf %13, %14 : vector<32x128xf32>
    %cst_13 = arith.constant dense<0.000000e+00> : vector<32x128xf32>
    %16 = tpu.matmul %2, %15, %cst_13 {dimension_numbers = #tpu.dot_dimension_numbers<[1], [0], [0], [1], [0, 0, 1, 1], [], []>} : vector<32x32xf32>, vector<32x128xf32>, vector<32x128xf32> -> vector<32x128xf32>
    %17 = vector.broadcast %4 : vector<32x1xf32> to vector<32x128xf32>
    %18 = arith.addf %16, %17 : vector<32x128xf32>
    %cst_14 = arith.constant 0.000000e+00 : f32
    %19 = vector.broadcast %cst_14 : f32 to vector<32x128xf32>
    %20 = arith.maximumf %18, %19 : vector<32x128xf32>
    %21 = vector.broadcast %5 : vector<32x1xf32> to vector<32x128xf32>
    %22 = arith.mulf %20, %21 : vector<32x128xf32>
    %cst_15 = arith.constant dense<0.000000e+00> : vector<128xf32>
    %23 = vector.multi_reduction <add>, %22, %cst_15 [0] : vector<32x128xf32> to vector<128xf32>
    %24 = vector.shape_cast %23 : vector<128xf32> to vector<1x128xf32>
    %25 = vector.broadcast %6 : vector<1x1xf32> to vector<1x128xf32>
    %26 = arith.addf %24, %25 : vector<1x128xf32>
    %c0_16 = arith.constant 0 : index
    %c0_17 = arith.constant 0 : index
    %27 = vector.load %arg4[%c0_16, %c0_17] : memref<1x128xf32, #tpu.memory_space<vmem>>, vector<1x128xf32>
    tpu.vector_store %arg4[%c0_16, %c0_17], %26 {strides = array<i32>} : memref<1x128xf32, #tpu.memory_space<vmem>>, vector<1x128xf32>,
    return
  }
  func.func @transform_0(%arg0: i32) -> (i32, i32) {
    %c0_i32 = arith.constant 0 : i32
    %c0_i32_0 = arith.constant 0 : i32
    return %c0_i32, %arg0 : i32, i32
  }
  func.func @transform_1(%arg0: i32) -> (i32, i32) {
    %c0_i32 = arith.constant 0 : i32
    %c0_i32_0 = arith.constant 0 : i32
    return %c0_i32, %arg0 : i32, i32
  }
  func.func @transform_2(%arg0: i32) -> (i32, i32) {
    %c0_i32 = arith.constant 0 : i32
    %c0_i32_0 = arith.constant 0 : i32
    %c0_i32_1 = arith.constant 0 : i32
    return %c0_i32, %c0_i32_0 : i32, i32
  }
  func.func @transform_3(%arg0: i32) -> (i32, i32) {
    %c0_i32 = arith.constant 0 : i32
    %c0_i32_0 = arith.constant 0 : i32
    return %c0_i32, %arg0 : i32, i32
  }
}

</mosaic_0001>

<llo_original>
// kernel: tpu_custom_call.1
$region0: #{tpu_custom_call.1}
  #allocation0 [shape = 'u32[]', space=smem, size = 0x4, offset = 0x4, fixed_abs, tag = 'smem constant byte address 0x4 - core index']
  #allocation1 [shape = 'u32[144,128]{1,0:T(1,128)}', space=vmem, size = 0x12000, scoped, tag = 'internal scratch']
  %s0 = inlined_call_operand.hbm [shape: f32[8,128], index: 0, kind: input, shape index: {}]
  %s1 = inlined_call_operand.hbm [shape: f32[4,128], index: 1, kind: input, shape index: {}]
  %s2 = inlined_call_operand.hbm [shape: f32[32,512], index: 2, kind: input, shape index: {}]
  %s3 = inlined_call_operand.hbm [shape: f32[1,128], index: 3, kind: output, shape index: {}]
  %s4 = sld [smem:[#allocation0]]
  $region34: #{tpu_custom_call.1} parent=0
    _
  %s6 = ssub.s32 1, %s4
  %s7 = scalar_select 0, %s6, %s4
  $region1: #{tpu_custom_call.1} parent=0
    #allocation2 [shape = 'u8[4096]{0}', space=vmem, size = 0x1000, scoped, tag = 'input window, operand 0, single buffered']
    #allocation3 [shape = 's32[1]{0}', space=sflag, size = 0x4, scoped, tag = 'scoped memory for tpu_custom_call.1']
    #allocation4 [shape = 's32[1]{0}', space=sflag, size = 0x4, scoped, tag = 'scoped memory for tpu_custom_call.1']
    #allocation5 [shape = 'u8[2048]{0}', space=vmem, size = 0x800, scoped, tag = 'input window, operand 1, single buffered']
    #allocation6 [shape = 's32[1]{0}', space=sflag, size = 0x4, scoped, tag = 'scoped memory for tpu_custom_call.1']
    #allocation7 [shape = 'u8[65536]{0}', space=vmem, size = 0x10000, scoped, tag = 'input window, operand 2, single buffered']
    #allocation8 [shape = 'u8[512]{0}', space=vmem, size = 0x400, scoped, tag = 'output window, operand 0, single buffered']
    %8 = vsyncpa [#allocation3], 0
    %9 = vsyncpa [#allocation6], 0
    %10 = vsyncpa [#allocation4], 0
    // Predicated region
    $region2: #{tpu_custom_call.1} parent=1 // pred_check
      _
    $region3: #{tpu_custom_call.1} parent=1 // pred_check_branch
      %12 = sbr.rel (0) target = $region5
    $region4: #{tpu_custom_call.1} parent=1 // pred_region
      %s14 = ssub.s32 128, 128
      %15 = vsyncadd [#allocation3], %s14
      %s17 = sshll.u32 [#allocation2], 4
      %s18 = int_to_ptr.vmem [resolvable:$true] %s17
      %20 = dma.hbm_to_vmem [thread:$0]  %s0, 128, %s18, [#allocation3]
    $region5: #{tpu_custom_call.1} parent=1 // pred_fallthru
      _
    // Predicated region
    $region6: #{tpu_custom_call.1} parent=1 // pred_check
      _
    $region7: #{tpu_custom_call.1} parent=1 // pred_check_branch
      %22 = sbr.rel (0) target = $region9
    $region8: #{tpu_custom_call.1} parent=1 // pred_region
      %s24 = ssub.s32 64, 64
      %25 = vsyncadd [#allocation6], %s24
      %s27 = sshll.u32 [#allocation5], 4
      %s28 = int_to_ptr.vmem [resolvable:$true] %s27
      %30 = dma.hbm_to_vmem [thread:$0]  %s1, 64, %s28, [#allocation6]
    $region9: #{tpu_custom_call.1} parent=1 // pred_fallthru
      _
    // Predicated region
    $region10: #{tpu_custom_call.1} parent=1 // pred_check
      _
    $region11: #{tpu_custom_call.1} parent=1 // pred_check_branch
      %32 = sbr.rel (0) target = $region13
    $region12: #{tpu_custom_call.1} parent=1 // pred_region
      %s34 = ssub.s32 2048, 2048
      %35 = vsyncadd [#allocation6], %s34
      %s36 = sshll.u32 [#allocation7], 4
      %s37 = int_to_ptr.vmem [resolvable:$true] %s36
      %42 = dma.hbm_to_vmem [thread:$0]  %s2, 2048, %s37, [#allocation6], 512, 512, 32
    $region13: #{tpu_custom_call.1} parent=1 // pred_fallthru
      _
    // Predicated region
    $region14: #{tpu_custom_call.1} parent=1 // pred_check
      _
    $region15: #{tpu_custom_call.1} parent=1 // pred_check_branch
      %44 = sbr.rel (0) target = $region17
    $region16: #{tpu_custom_call.1} parent=1 // pred_region
      %45 = dma.done [#allocation3], 128
    $region17: #{tpu_custom_call.1} parent=1 // pred_fallthru
      _
    // Predicated region
    $region18: #{tpu_custom_call.1} parent=1 // pred_check
      _
    $region19: #{tpu_custom_call.1} parent=1 // pred_check_branch
      %47 = sbr.rel (0) target = $region21
    $region20: #{tpu_custom_call.1} parent=1 // pred_region
      %48 = dma.done [#allocation6], 64
    $region21: #{tpu_custom_call.1} parent=1 // pred_fallthru
      _
    // Predicated region
    $region22: #{tpu_custom_call.1} parent=1 // pred_check
      _
    $region23: #{tpu_custom_call.1} parent=1 // pred_check_branch
      %50 = sbr.rel (0) target = $region25
    $region24: #{tpu_custom_call.1} parent=1 // pred_region
      %51 = dma.done [#allocation6], 2048
    $region25: #{tpu_custom_call.1} parent=1 // pred_fallthru
      _
    %v52 = vld [vmem:[#allocation7] sm:$0xff]
    %v53 = vld [vmem:[#allocation7 + $0x20] sm:$0xff]
    %v54 = vld [vmem:[#allocation7 + $0x40] sm:$0xff]
    %v55 = vld [vmem:[#allocation7 + $0x60] sm:$0xff]
    %v56 = vld [vmem:[#allocation7 + $0x8] sm:$0xff]
    %v57 = vld [vmem:[#allocation7 + $0x28] sm:$0xff]
    %v58 = vld [vmem:[#allocation7 + $0x48] sm:$0xff]
    %v59 = vld [vmem:[#allocation7 + $0x68] sm:$0xff]
    %v60 = vld [vmem:[#allocation7 + $0x10] sm:$0xff]
    %v61 = vld [vmem:[#allocation7 + $0x30] sm:$0xff]
    %v62 = vld [vmem:[#allocation7 + $0x50] sm:$0xff]
    %v63 = vld [vmem:[#allocation7 + $0x70] sm:$0xff]
    %v64 = vld [vmem:[#allocation7 + $0x18] sm:$0xff]
    %v65 = vld [vmem:[#allocation7 + $0x38] sm:$0xff]
    %v66 = vld [vmem:[#allocation7 + $0x58] sm:$0xff]
    %v67 = vld [vmem:[#allocation7 + $0x78] sm:$0xff]
    %v68 = vld [vmem:[#allocation7 + $0x18] ss:$0 sm:$0xff]
    %v69 = vld [vmem:[#allocation2] sm:$0xff]
    %v70 = vld [vmem:[#allocation5] sm:$0xf]
    %vm71 = vcmask 31744
    %v73 = vsel %vm71, %v56, 0
    %v76 = vsel %vm71, %v57, 0
    %v79 = vsel %vm71, %v58, 0
    %v82 = vsel %vm71, %v59, 0
    %vm84 = vcmask 1043456
    %v86 = vsel %vm84, %v70, 0
    %88 = vmatprep.subr.mxu0 0.0
    %89 = vmatpush1.msra.mxu0 0.0
    %90 = vmatprep.subr.mxu0 0.0
    %91 = vmatpush1.msra.mxu0 0.0
    %92 = vmatprep.subr.mxu0 0.0
    %93 = vmatpush1.msra.mxu0 0.0
    %94 = vmatprep.subr.mxu0 0.0
    %95 = vmatpush1.msra.mxu0 0.0
    %96 = vmatprep.subr.mxu0 0.0
    %97 = vmatpush1.msra.mxu0 0.0
    %98 = vmatprep.subr.mxu0 0.0
    %99 = vmatpush1.msra.mxu0 0.0
    %100 = vmatprep.subr.mxu0 0.0
    %101 = vmatpush1.msra.mxu0 0.0
    %102 = vmatprep.subr.mxu0 0.0
    %103 = vmatpush1.msra.mxu0 0.0
    %104 = vmatprep.subr.mxu0 0.0
    %105 = vmatpush1.msra.mxu0 0.0
    %106 = vmatprep.subr.mxu0 0.0
    %107 = vmatpush1.msra.mxu0 0.0
    %108 = vmatprep.subr.mxu0 0.0
    %109 = vmatpush1.msra.mxu0 0.0
    %110 = vmatprep.subr.mxu0 0.0
    %111 = vmatpush1.msra.mxu0 0.0
    %112 = vmatprep.subr.mxu0 0.0
    %113 = vmatpush1.msra.mxu0 0.0
    %114 = vmatprep.subr.mxu0 0.0
    %115 = vmatpush1.msra.mxu0 0.0
    %116 = vmatprep.subr.mxu0 0.0
    %117 = vmatpush1.msra.mxu0 0.0
    %118 = vmatprep.subr.mxu0 0.0
    %119 = vmatpush1.msra.mxu0 %v86
    %120 = vmatprep.subr.mxu0 0.0
    %121 = vmatpush2.msra.mxu0 0.0
    %122 = vmatprep.subr.mxu0 0.0
    %123 = vmatpush2.msra.mxu0 0.0
    %124 = vmatprep.subr.mxu0 0.0
    %125 = vmatpush2.msra.mxu0 0.0
    %126 = vmatprep.subr.mxu0 0.0
    %127 = vmatpush2.msra.mxu0 0.0
    %128 = vmatprep.subr.mxu0 0.0
    %129 = vmatpush2.msra.mxu0 0.0
    %130 = vmatprep.subr.mxu0 0.0
    %131 = vmatpush2.msra.mxu0 0.0
    %132 = vmatprep.subr.mxu0 0.0
    %133 = vmatpush2.msra.mxu0 0.0
    %134 = vmatprep.subr.mxu0 0.0
    %135 = vmatpush2.msra.mxu0 0.0
    %136 = vmatprep.subr.mxu0 0.0
    %137 = vmatpush2.msra.mxu0 0.0
    %138 = vmatprep.subr.mxu0 0.0
    %139 = vmatpush2.msra.mxu0 0.0
    %140 = vmatprep.subr.mxu0 0.0
    %141 = vmatpush2.msra.mxu0 0.0
    %142 = vmatprep.subr.mxu0 0.0
    %143 = vmatpush2.msra.mxu0 0.0
    %144 = vmatprep.subr.mxu0 0.0
    %145 = vmatpush2.msra.mxu0 0.0
    %146 = vmatprep.subr.mxu0 0.0
    %147 = vmatpush2.msra.mxu0 0.0
    %148 = vmatprep.subr.mxu0 0.0
    %149 = vmatpush2.msra.mxu0 0.0
    %150 = vmatprep.subr.mxu0 0.0
    %151 = vmatpush2.msra.mxu0 0.0
    %152 = vmatprep.mubr.f32.mxu0 0.0
    %153 = vmatmul.mubr.f32.gmra.mxu0 %v73
    %v154 = vpop.f32.mrf.mxu0
    %v155 = vadd.f32 0.0, %v154
    %v156 = vpop.f32.mrf.mxu0
    %157 = vmatprep.mubr.f32.mxu0 0.0
    %158 = vmatmul.mubr.f32.gmra.mxu0 %v76
    %v159 = vpop.f32.mrf.mxu0
    %v160 = vadd.f32 0.0, %v159
    %v161 = vpop.f32.mrf.mxu0
    %162 = vmatprep.mubr.f32.mxu0 0.0
    %163 = vmatmul.mubr.f32.gmra.mxu0 %v79
    %v164 = vpop.f32.mrf.mxu0
    %v165 = vadd.f32 0.0, %v164
    %v166 = vpop.f32.mrf.mxu0
    %167 = vmatprep.mubr.f32.mxu0 0.0
    %168 = vmatmul.mubr.f32.gmra.mxu0 %v82
    %v169 = vpop.f32.mrf.mxu0
    %v170 = vadd.f32 0.0, %v169
    %v171 = vpop.f32.mrf.mxu0
    %172 = vdwg.mxu0
    %vm173 = vcmask 64512
    %v175 = vsel %vm173, %v52, 0
    %v178 = vsel %vm173, %v53, 0
    %v181 = vsel %vm173, %v54, 0
    %v184 = vsel %vm173, %v55, 0
    %186 = vmatprep.subr.mxu0 0.0
    %187 = vmatpush1.msra.mxu0 0.0
    %188 = vmatprep.subr.mxu0 0.0
    %189 = vmatpush1.msra.mxu0 0.0
    %190 = vmatprep.subr.mxu0 0.0
    %191 = vmatpush1.msra.mxu0 0.0
    %192 = vmatprep.subr.mxu0 0.0
    %193 = vmatpush1.msra.mxu0 0.0
    %194 = vmatprep.subr.mxu0 0.0
    %195 = vmatpush1.msra.mxu0 0.0
    %196 = vmatprep.subr.mxu0 0.0
    %197 = vmatpush1.msra.mxu0 0.0
    %198 = vmatprep.subr.mxu0 0.0
    %199 = vmatpush1.msra.mxu0 0.0
    %200 = vmatprep.subr.mxu0 0.0
    %201 = vmatpush1.msra.mxu0 0.0
    %202 = vmatprep.subr.mxu0 0.0
    %203 = vmatpush1.msra.mxu0 0.0
    %204 = vmatprep.subr.mxu0 0.0
    %205 = vmatpush1.msra.mxu0 0.0
    %206 = vmatprep.subr.mxu0 0.0
    %207 = vmatpush1.msra.mxu0 0.0
    %208 = vmatprep.subr.mxu0 0.0
    %209 = vmatpush1.msra.mxu0 0.0
    %210 = vmatprep.subr.mxu0 0.0
    %211 = vmatpush1.msra.mxu0 0.0
    %212 = vmatprep.subr.mxu0 0.0
    %213 = vmatpush1.msra.mxu0 0.0
    %214 = vmatprep.subr.mxu0 0.0
    %215 = vmatpush1.msra.mxu0 0.0
    %216 = vmatprep.subr.mxu0 0.0
    %217 = vmatpush1.msra.mxu0 %v69
    %218 = vmatprep.subr.mxu0 0.0
    %219 = vmatpush2.msra.mxu0 0.0
    %220 = vmatprep.subr.mxu0 0.0
    %221 = vmatpush2.msra.mxu0 0.0
    %222 = vmatprep.subr.mxu0 0.0
    %223 = vmatpush2.msra.mxu0 0.0
    %224 = vmatprep.subr.mxu0 0.0
    %225 = vmatpush2.msra.mxu0 0.0
    %226 = vmatprep.subr.mxu0 0.0
    %227 = vmatpush2.msra.mxu0 0.0
    %228 = vmatprep.subr.mxu0 0.0
    %229 = vmatpush2.msra.mxu0 0.0
    %230 = vmatprep.subr.mxu0 0.0
    %231 = vmatpush2.msra.mxu0 0.0
    %232 = vmatprep.subr.mxu0 0.0
    %233 = vmatpush2.msra.mxu0 0.0
    %234 = vmatprep.subr.mxu0 0.0
    %235 = vmatpush2.msra.mxu0 0.0
    %236 = vmatprep.subr.mxu0 0.0
    %237 = vmatpush2.msra.mxu0 0.0
    %238 = vmatprep.subr.mxu0 0.0
    %239 = vmatpush2.msra.mxu0 0.0
    %240 = vmatprep.subr.mxu0 0.0
    %241 = vmatpush2.msra.mxu0 0.0
    %242 = vmatprep.subr.mxu0 0.0
    %243 = vmatpush2.msra.mxu0 0.0
    %244 = vmatprep.subr.mxu0 0.0
    %245 = vmatpush2.msra.mxu0 0.0
    %246 = vmatprep.subr.mxu0 0.0
    %247 = vmatpush2.msra.mxu0 0.0
    %248 = vmatprep.subr.mxu0 0.0
    %249 = vmatpush2.msra.mxu0 0.0
    %250 = vmatprep.mubr.f32.mxu0 0.0
    %251 = vmatmul.mubr.f32.gmra.mxu0 %v175
    %v252 = vpop.f32.mrf.mxu0
    %v253 = vadd.f32 %v155, %v252
    %v254 = vpop.f32.mrf.mxu0
    %255 = vmatprep.mubr.f32.mxu0 0.0
    %256 = vmatmul.mubr.f32.gmra.mxu0 %v178
    %v257 = vpop.f32.mrf.mxu0
    %v258 = vadd.f32 %v160, %v257
    %v259 = vpop.f32.mrf.mxu0
    %260 = vmatprep.mubr.f32.mxu0 0.0
    %261 = vmatmul.mubr.f32.gmra.mxu0 %v181
    %v262 = vpop.f32.mrf.mxu0
    %v263 = vadd.f32 %v165, %v262
    %v264 = vpop.f32.mrf.mxu0
    %265 = vmatprep.mubr.f32.mxu0 0.0
    %266 = vmatmul.mubr.f32.gmra.mxu0 %v184
    %v267 = vpop.f32.mrf.mxu0
    %v268 = vadd.f32 %v170, %v267
    %v269 = vpop.f32.mrf.mxu0
    %270 = vdwg.mxu0
    %272 = vset.pattern.permute.xlu0 0
    %273 = vperm.xlu0 %272, %v64
    %v274 = vpop.permute.xlu0 %273
    %277 = vset.pattern.permute.xlu0 0
    %278 = vperm.xlu0 %277, %v65
    %v279 = vpop.permute.xlu0 %278
    %282 = vset.pattern.permute.xlu0 0
    %283 = vperm.xlu0 %282, %v66
    %v284 = vpop.permute.xlu0 %283
    %287 = vset.pattern.permute.xlu0 0
    %288 = vperm.xlu0 %287, %v67
    %v289 = vpop.permute.xlu0 %288
    %v291 = vadd.f32 %v253, %v274
    %v292 = vadd.f32 %v258, %v279
    %v293 = vadd.f32 %v263, %v284
    %v294 = vadd.f32 %v268, %v289
    %v295 = vmax.f32 %v291, 0.0
    %v296 = vmax.f32 %v292, 0.0
    %v297 = vmax.f32 %v293, 0.0
    %v298 = vmax.f32 %v294, 0.0
    %299 = vset.pattern.permute.xlu0 1
    %300 = vperm.xlu0 %299, %v64
    %v301 = vpop.permute.xlu0 %300
    %303 = vset.pattern.permute.xlu0 1
    %304 = vperm.xlu0 %303, %v65
    %v305 = vpop.permute.xlu0 %304
    %307 = vset.pattern.permute.xlu0 1
    %308 = vperm.xlu0 %307, %v66
    %v309 = vpop.permute.xlu0 %308
    %311 = vset.pattern.permute.xlu0 1
    %312 = vperm.xlu0 %311, %v67
    %v313 = vpop.permute.xlu0 %312
    %vm315 = vcmask 261120
    %v317 = vsel %vm315, %v60, 0
    %v320 = vsel %vm315, %v61, 0
    %v323 = vsel %vm315, %v62, 0
    %v326 = vsel %vm315, %v63, 0
    %328 = vmatprep.subr.mxu0 0.0
    %329 = vmatpush1.msra.mxu0 0.0
    %330 = vmatprep.subr.mxu0 0.0
    %331 = vmatpush1.msra.mxu0 0.0
    %332 = vmatprep.subr.mxu0 0.0
    %333 = vmatpush1.msra.mxu0 0.0
    %334 = vmatprep.subr.mxu0 0.0
    %335 = vmatpush1.msra.mxu0 0.0
    %336 = vmatprep.subr.mxu0 0.0
    %337 = vmatpush1.msra.mxu0 0.0
    %338 = vmatprep.subr.mxu0 0.0
    %339 = vmatpush1.msra.mxu0 0.0
    %340 = vmatprep.subr.mxu0 0.0
    %341 = vmatpush1.msra.mxu0 0.0
    %342 = vmatprep.subr.mxu0 0.0
    %343 = vmatpush1.msra.mxu0 0.0
    %344 = vmatprep.subr.mxu0 0.0
    %345 = vmatpush1.msra.mxu0 0.0
    %346 = vmatprep.subr.mxu0 0.0
    %347 = vmatpush1.msra.mxu0 0.0
    %348 = vmatprep.subr.mxu0 0.0
    %349 = vmatpush1.msra.mxu0 0.0
    %350 = vmatprep.subr.mxu0 0.0
    %351 = vmatpush1.msra.mxu0 0.0
    %352 = vmatprep.subr.mxu0 0.0
    %353 = vmatpush1.msra.mxu0 %v298
    %354 = vmatprep.subr.mxu0 0.0
    %355 = vmatpush1.msra.mxu0 %v297
    %356 = vmatprep.subr.mxu0 0.0
    %357 = vmatpush1.msra.mxu0 %v296
    %358 = vmatprep.subr.mxu0 0.0
    %359 = vmatpush1.msra.mxu0 %v295
    %360 = vmatprep.subr.mxu0 0.0
    %361 = vmatpush2.msra.mxu0 0.0
    %362 = vmatprep.subr.mxu0 0.0
    %363 = vmatpush2.msra.mxu0 0.0
    %364 = vmatprep.subr.mxu0 0.0
    %365 = vmatpush2.msra.mxu0 0.0
    %366 = vmatprep.subr.mxu0 0.0
    %367 = vmatpush2.msra.mxu0 0.0
    %368 = vmatprep.subr.mxu0 0.0
    %369 = vmatpush2.msra.mxu0 0.0
    %370 = vmatprep.subr.mxu0 0.0
    %371 = vmatpush2.msra.mxu0 0.0
    %372 = vmatprep.subr.mxu0 0.0
    %373 = vmatpush2.msra.mxu0 0.0
    %374 = vmatprep.subr.mxu0 0.0
    %375 = vmatpush2.msra.mxu0 0.0
    %376 = vmatprep.subr.mxu0 0.0
    %377 = vmatpush2.msra.mxu0 0.0
    %378 = vmatprep.subr.mxu0 0.0
    %379 = vmatpush2.msra.mxu0 0.0
    %380 = vmatprep.subr.mxu0 0.0
    %381 = vmatpush2.msra.mxu0 0.0
    %382 = vmatprep.subr.mxu0 0.0
    %383 = vmatpush2.msra.mxu0 0.0
    %384 = vmatprep.subr.mxu0 0.0
    %385 = vmatpush2.msra.mxu0 0.0
    %386 = vmatprep.subr.mxu0 0.0
    %387 = vmatpush2.msra.mxu0 0.0
    %388 = vmatprep.subr.mxu0 0.0
    %389 = vmatpush2.msra.mxu0 0.0
    %390 = vmatprep.subr.mxu0 0.0
    %391 = vmatpush2.msra.mxu0 0.0
    %392 = vmatprep.mubr.f32.mxu0 0.0
    %393 = vmatmul.mubr.f32.gmra.mxu0 %v317
    %v394 = vpop.f32.mrf.mxu0
    %v395 = vadd.f32 %v301, %v394
    %v396 = vpop.f32.mrf.mxu0
    %397 = vmatprep.mubr.f32.mxu0 0.0
    %398 = vmatmul.mubr.f32.gmra.mxu0 %v320
    %v399 = vpop.f32.mrf.mxu0
    %v400 = vadd.f32 %v305, %v399
    %v401 = vpop.f32.mrf.mxu0
    %402 = vmatprep.mubr.f32.mxu0 0.0
    %403 = vmatmul.mubr.f32.gmra.mxu0 %v323
    %v404 = vpop.f32.mrf.mxu0
    %v405 = vadd.f32 %v309, %v404
    %v406 = vpop.f32.mrf.mxu0
    %407 = vmatprep.mubr.f32.mxu0 0.0
    %408 = vmatmul.mubr.f32.gmra.mxu0 %v326
    %v409 = vpop.f32.mrf.mxu0
    %v410 = vadd.f32 %v313, %v409
    %v411 = vpop.f32.mrf.mxu0
    %412 = vdwg.mxu0
    %v413 = vmax.f32 %v395, 0.0
    %v414 = vmax.f32 %v400, 0.0
    %v415 = vmax.f32 %v405, 0.0
    %v416 = vmax.f32 %v410, 0.0
    %417 = vset.pattern.permute.xlu0 2
    %418 = vperm.xlu0 %417, %v64
    %v419 = vpop.permute.xlu0 %418
    %421 = vset.pattern.permute.xlu0 2
    %422 = vperm.xlu0 %421, %v65
    %v423 = vpop.permute.xlu0 %422
    %425 = vset.pattern.permute.xlu0 2
    %426 = vperm.xlu0 %425, %v66
    %v427 = vpop.permute.xlu0 %426
    %429 = vset.pattern.permute.xlu0 2
    %430 = vperm.xlu0 %429, %v67
    %v431 = vpop.permute.xlu0 %430
    %v433 = vmul.f32 %v413, %v419
    %v434 = vmul.f32 %v414, %v423
    %v435 = vmul.f32 %v415, %v427
    %v436 = vmul.f32 %v416, %v431
    %v437 = vadd.f32 %v433, %v434
    %v438 = vadd.f32 %v437, %v435
    %v439 = vadd.f32 %v438, %v436
    %v440 = vrot.slane %v439, 4
    %v441 = vadd.f32 %v439, %v440
    %v442 = vrot.slane %v441, 2
    %v443 = vadd.f32 %v441, %v442
    %v444 = vrot.slane %v443, 1
    %v445 = vadd.f32 %v443, %v444
    %447 = vset.pattern.permute.xlu0 3
    %448 = vperm.xlu0 %447, %v68
    %v449 = vpop.permute.xlu0 %448
    %v451 = vadd.f32 %v445, %v449
    %452 = vst [vmem:[#allocation8] sm:$0x1] %v451
    // Predicated region
    $region26: #{tpu_custom_call.1} parent=1 // pred_check
      _
    $region27: #{tpu_custom_call.1} parent=1 // pred_check_branch
      %454 = sbr.rel (0) target = $region29
    $region28: #{tpu_custom_call.1} parent=1 // pred_region
      %s456 = ssub.s32 16, 16
      %457 = vsyncadd [#allocation4], %s456
      %s459 = sshll.u32 [#allocation8], 4
      %s460 = int_to_ptr.vmem [resolvable:$true] %s459
      %462 = dma.vmem_to_hbm [thread:$0]  %s460, 16, %s3, [#allocation4]
    $region29: #{tpu_custom_call.1} parent=1 // pred_fallthru
      _
    // Predicated region
    $region30: #{tpu_custom_call.1} parent=1 // pred_check
      _
    $region31: #{tpu_custom_call.1} parent=1 // pred_check_branch
      %464 = sbr.rel (0) target = $region33
    $region32: #{tpu_custom_call.1} parent=1 // pred_region
      %465 = dma.done [#allocation4], 16
    $region33: #{tpu_custom_call.1} parent=1 // pred_fallthru
      _
    %466 = vsyncpa [#allocation3], 1
    %467 = vsyncpa [#allocation6], 1
    %468 = vsyncpa [#allocation4], 1

</llo_original>
